<compile_context>
chip_gen: v7x
topology: tpu7x:2x2x1
jax: 0.10.0
libtpu: 0.0.40
codegen_flags: <defaults>
</compile_context>

<pallas_src>
import functools
import math

import jax
import jax.numpy as jnp
from jax.experimental import pallas as pl
from jax.experimental.pallas import tpu as pltpu


# ----------------------------------------------------------------------------
# Pallas kernels: one per KGE scoring function.
# Each receives VMEM tiles shaped (TB, TN, D) for the per-negative operand and
# (TB, 1, D) for the shared operands (broadcast in-kernel); writes (TB, TN).
# Static constants (gamma, scales, head_batch flag) are baked in via partial.
# ----------------------------------------------------------------------------

def _transe_kernel(gamma, head_batch, h_ref, r_ref, t_ref, o_ref):
    h, r, t = h_ref[...], r_ref[...], t_ref[...]
    # shared-operand math stays on the (TB,1,D) shape; one big VPU pass total
    s = h + (r - t) if head_batch else (h + r) - t
    o_ref[...] = gamma - jnp.sum(jnp.abs(s), axis=2)


def _distmult_kernel(head_batch, h_ref, r_ref, t_ref, o_ref):
    h, r, t = h_ref[...], r_ref[...], t_ref[...]
    s = h * (r * t) if head_batch else (h * r) * t
    o_ref[...] = jnp.sum(s, axis=2)


def _complex_kernel(head_batch, reh_ref, imh_ref, rer_ref, imr_ref,
                    ret_ref, imt_ref, o_ref):
    re_h, im_h = reh_ref[...], imh_ref[...]
    re_r, im_r = rer_ref[...], imr_ref[...]
    re_t, im_t = ret_ref[...], imt_ref[...]
    if head_batch:
        # re_r/im_r/re_t/im_t are shared (TB,1,D): small ops, then 3 big ops
        re_s = re_r * re_t + im_r * im_t
        im_s = re_r * im_t - im_r * re_t
        s = re_h * re_s + im_h * im_s
    else:
        re_s = re_h * re_r - im_h * im_r
        im_s = re_h * im_r + im_h * re_r
        s = re_s * re_t + im_s * im_t
    o_ref[...] = jnp.sum(s, axis=2)


def _rotate_kernel(gamma, inv_scale, head_batch, reh_ref, imh_ref, r_ref,
                   ret_ref, imt_ref, o_ref):
    re_h, im_h = reh_ref[...], imh_ref[...]
    re_t, im_t = ret_ref[...], imt_ref[...]
    # relation tile is (TB, 1, Dr): cos/sin run ONCE per tile (single EUP slot
    # stays light) and are broadcast over the negative axis below.
    phase = r_ref[...] * inv_scale          # multiply by precomputed reciprocal
    re_r = jnp.cos(phase)
    im_r = jnp.sin(phase)
    if head_batch:
        re_s = re_r * re_t + im_r * im_t    # shared * shared -> small
        im_s = re_r * im_t - im_r * re_t
        re_s = re_s - re_h                  # big
        im_s = im_s - im_h                  # big
    else:
        re_s = re_h * re_r - im_h * im_r    # shared * shared -> small
        im_s = re_h * im_r + im_h * re_r
        re_s = re_s - re_t                  # big
        im_s = im_s - im_t                  # big
    # torch.stack([re, im], 0).norm(dim=0) == sqrt(re^2 + im^2)
    mag = jnp.sqrt(re_s * re_s + im_s * im_s)
    o_ref[...] = gamma - jnp.sum(mag, axis=2)


def _protate_kernel(gamma, inv_scale, modulus, head_batch,
                    h_ref, r_ref, t_ref, o_ref):
    # per-operand scaling (matches the reference FP order exactly); shared
    # operands are (TB,1,D) so at most one of these muls is full-size.
    ph = h_ref[...] * inv_scale
    pr = r_ref[...] * inv_scale
    pt = t_ref[...] * inv_scale
    s = ph + (pr - pt) if head_batch else (ph + pr) - pt
    s = jnp.abs(jnp.sin(s))
    o_ref[...] = gamma - jnp.sum(s, axis=2) * modulus


# ----------------------------------------------------------------------------
# Tiled pallas_call runner.
# ----------------------------------------------------------------------------

def _choose_tiles(inputs, batch, neg, budget_bytes=6 << 20):
    """Pick (TB, TN).

    TB: multiple of 8 dividing batch (full batch if not divisible by 8).
    TN: multiple of 128 dividing neg when possible (lane-dense, unmasked output
        stores), sized so one buffer set of the per-negative operands stays
        under ~budget_bytes (x2 when double-buffered by the pipeline).
    """
    per_neg_bytes = sum(x.shape[2] * x.dtype.itemsize
                        for x in inputs if x.shape[1] != 1)
    per_neg_bytes = max(per_neg_bytes + 4, 8)      # + f32 output element

    tb = batch if (batch % 8 != 0) else 8

    if neg % 128 != 0:
        tn = neg                                    # small / ragged N: full-extent block
    else:
        cap = max(128, (budget_bytes // max(1, tb * per_neg_bytes)) // 128 * 128)
        cand = min(neg, cap, 2048)
        cand = (cand // 128) * 128
        tn = 128
        while cand >= 128:
            if neg % cand == 0:
                tn = cand
                break
            cand -= 128

    # Amortize per-step overhead: grow TB (by divisors of batch) while the
    # per-negative tile still fits the budget.
    if batch % 8 == 0:
        t = tb
        while (t * 2 <= batch and batch % (t * 2) == 0
               and (t * 2) * tn * per_neg_bytes <= budget_bytes):
            t *= 2
        tb = t

    return tb, tn


def _run_score_kernel(kernel, inputs, batch, neg):
    tb, tn = _choose_tiles(inputs, batch, neg)
    grid = (batch // tb, neg // tn)

    in_specs = []
    for x in inputs:
        d = x.shape[2]
        if x.shape[1] == 1:
            # Shared (positive-side) operand: one block along the negative axis,
            # broadcast inside the kernel.  Block index is constant across the
            # inner (negative) grid axis -> no redundant DMA per inner step.
            in_specs.append(pl.BlockSpec((tb, 1, d), lambda i, j: (i, 0, 0)))
        else:
            in_specs.append(pl.BlockSpec((tb, tn, d), lambda i, j: (i, j, 0)))

    return pl.pallas_call(
        kernel,
        out_shape=jax.ShapeDtypeStruct((batch, neg), jnp.float32),
        grid_spec=pltpu.PrefetchScalarGridSpec(
            num_scalar_prefetch=0,
            grid=grid,
            in_specs=in_specs,
            out_specs=pl.BlockSpec((tb, tn), lambda i, j: (i, j)),
        ),
        compiler_params=pltpu.CompilerParams(
            dimension_semantics=("parallel", "parallel"),
            vmem_limit_bytes=32 * 1024 * 1024,
        ),
    )(*inputs)


# ----------------------------------------------------------------------------
# Model wrapper (parameter setup + gathers in plain JAX, scoring in Pallas).
# ----------------------------------------------------------------------------

class KGEModelPallas:
    def __init__(self, model_name, nentity, nrelation, hidden_dim, gamma,
                 double_entity_embedding=False, double_relation_embedding=False,
                 seed=0):
        if model_name not in ['TransE', 'DistMult', 'ComplEx', 'RotatE', 'pRotatE']:
            raise ValueError('model %s not supported' % model_name)
        if model_name == 'RotatE' and (not double_entity_embedding or double_relation_embedding):
            raise ValueError('RotatE should use --double_entity_embedding')
        if model_name == 'ComplEx' and (not double_entity_embedding or not double_relation_embedding):
            raise ValueError('ComplEx should use double entity and relation embedding')

        self.model_name = model_name
        self.nentity = nentity
        self.nrelation = nrelation
        self.hidden_dim = hidden_dim
        self.epsilon = 2.0
        self.gamma = float(gamma)
        self.embedding_range = (self.gamma + self.epsilon) / hidden_dim
        self.entity_dim = hidden_dim * 2 if double_entity_embedding else hidden_dim
        self.relation_dim = hidden_dim * 2 if double_relation_embedding else hidden_dim

        key = jax.random.PRNGKey(seed)
        k_ent, k_rel = jax.random.split(key)
        r = self.embedding_range
        self.entity_embedding = jax.random.uniform(
            k_ent, (nentity, self.entity_dim), minval=-r, maxval=r, dtype=jnp.float32)
        self.relation_embedding = jax.random.uniform(
            k_rel, (nrelation, self.relation_dim), minval=-r, maxval=r, dtype=jnp.float32)
        if model_name == 'pRotatE':
            self.modulus = 0.5 * self.embedding_range  # torch shape (1,1); scalar here

        # One-time real/imag table splits so ComplEx/RotatE kernels never slice
        # the lane axis at a non-128-aligned boundary.
        if model_name in ('ComplEx', 'RotatE'):
            d = self.entity_dim // 2
            self._ent_re = self.entity_embedding[:, :d]
            self._ent_im = self.entity_embedding[:, d:]
        if model_name == 'ComplEx':
            dr = self.relation_dim // 2
            self._rel_re = self.relation_embedding[:, :dr]
            self._rel_im = self.relation_embedding[:, dr:]

    @staticmethod
    def _gather(table, idx, neg_axis_first=False):
        if idx.ndim == 1:
            g = jnp.take(table, idx, axis=0)                     # (B, D)
            return g[None, :, :] if neg_axis_first else g[:, None, :]
        b, n = idx.shape
        return jnp.take(table, idx.reshape(-1), axis=0).reshape(b, n, -1)

    # ---- forward ----
    def __call__(self, sample, mode='single'):
        if mode == 'single':
            batch_size = sample.shape[0]
            h_idx, r_idx, t_idx = sample[:, 0], sample[:, 1], sample[:, 2]
            kb, kn = 1, batch_size            # batch rides the lane-friendly axis
            single = True
        elif mode == 'head-batch':
            tail_part, head_part = sample
            batch_size, neg = head_part.shape
            h_idx, r_idx, t_idx = head_part, tail_part[:, 1], tail_part[:, 2]
            kb, kn = batch_size, neg
            single = False
        elif mode == 'tail-batch':
            head_part, tail_part = sample
            batch_size, neg = tail_part.shape
            h_idx, r_idx, t_idx = head_part[:, 0], head_part[:, 1], tail_part
            kb, kn = batch_size, neg
            single = False
        else:
            raise ValueError('mode %s not supported' % mode)

        g = functools.partial(self._gather, neg_axis_first=single)
        hb = (mode == 'head-batch')
        name = self.model_name

        if name == 'TransE':
            inputs = [g(self.entity_embedding, h_idx),
                      g(self.relation_embedding, r_idx),
                      g(self.entity_embedding, t_idx)]
            kern = functools.partial(_transe_kernel, self.gamma, hb)
        elif name == 'DistMult':
            inputs = [g(self.entity_embedding, h_idx),
                      g(self.relation_embedding, r_idx),
                      g(self.entity_embedding, t_idx)]
            kern = functools.partial(_distmult_kernel, hb)
        elif name == 'ComplEx':
            inputs = [g(self._ent_re, h_idx), g(self._ent_im, h_idx),
                      g(self._rel_re, r_idx), g(self._rel_im, r_idx),
                      g(self._ent_re, t_idx), g(self._ent_im, t_idx)]
            kern = functools.partial(_complex_kernel, hb)
        elif name == 'RotatE':
            inv_scale = math.pi / self.embedding_range   # pi = 3.141592653589793
            inputs = [g(self._ent_re, h_idx), g(self._ent_im, h_idx),
                      g(self.relation_embedding, r_idx),
                      g(self._ent_re, t_idx), g(self._ent_im, t_idx)]
            kern = functools.partial(_rotate_kernel, self.gamma, inv_scale, hb)
        else:  # pRotatE
            pi = 3.1415926235897933                      # constant as in the PyTorch source
            inv_scale = pi / self.embedding_range
            inputs = [g(self.entity_embedding, h_idx),
                      g(self.relation_embedding, r_idx),
                      g(self.entity_embedding, t_idx)]
            kern = functools.partial(_protate_kernel, self.gamma, inv_scale,
                                     self.modulus, hb)

        score = _run_score_kernel(kern, inputs, kb, kn)
        if single:
            score = score.reshape(batch_size, 1)
        return score

    # ---- pure-JAX reference mirroring the torch math exactly ----
    def reference(self, sample, mode='single'):
        ent, rel = self.entity_embedding, self.relation_embedding
        if mode == 'single':
            head = jnp.take(ent, sample[:, 0], axis=0)[:, None, :]
            relation = jnp.take(rel, sample[:, 1], axis=0)[:, None, :]
            tail = jnp.take(ent, sample[:, 2], axis=0)[:, None, :]
        elif mode == 'head-batch':
            tail_part, head_part = sample
            b, n = head_part.shape
            head = jnp.take(ent, head_part.reshape(-1), axis=0).reshape(b, n, -1)
            relation = jnp.take(rel, tail_part[:, 1], axis=0)[:, None, :]
            tail = jnp.take(ent, tail_part[:, 2], axis=0)[:, None, :]
        else:
            head_part, tail_part = sample
            b, n = tail_part.shape
            head = jnp.take(ent, head_part[:, 0], axis=0)[:, None, :]
            relation = jnp.take(rel, head_part[:, 1], axis=0)[:, None, :]
            tail = jnp.take(ent, tail_part.reshape(-1), axis=0).reshape(b, n, -1)

        hb = (mode == 'head-batch')
        name = self.model_name
        if name == 'TransE':
            s = head + (relation - tail) if hb else head + relation - tail
            return self.gamma - jnp.sum(jnp.abs(s), axis=2)
        if name == 'DistMult':
            s = head * (relation * tail) if hb else head * relation * tail
            return jnp.sum(s, axis=2)
        if name == 'ComplEx':
            re_h, im_h = jnp.split(head, 2, axis=2)
            re_r, im_r = jnp.split(relation, 2, axis=2)
            re_t, im_t = jnp.split(tail, 2, axis=2)
            if hb:
                re_s = re_r * re_t + im_r * im_t
                im_s = re_r * im_t - im_r * re_t
                s = re_h * re_s + im_h * im_s
            else:
                re_s = re_h * re_r - im_h * im_r
                im_s = re_h * im_r + im_h * re_r
                s = re_s * re_t + im_s * im_t
            return jnp.sum(s, axis=2)
        if name == 'RotatE':
            pi = 3.141592653589793
            re_h, im_h = jnp.split(head, 2, axis=2)
            re_t, im_t = jnp.split(tail, 2, axis=2)
            phase = relation / (self.embedding_range / pi)
            re_r, im_r = jnp.cos(phase), jnp.sin(phase)
            if hb:
                re_s = re_r * re_t + im_r * im_t
                im_s = re_r * im_t - im_r * re_t
                re_s, im_s = re_s - re_h, im_s - im_h
            else:
                re_s = re_h * re_r - im_h * im_r
                im_s = re_h * im_r + im_h * re_r
                re_s, im_s = re_s - re_t, im_s - im_t
            return self.gamma - jnp.sum(jnp.sqrt(re_s ** 2 + im_s ** 2), axis=2)
        # pRotatE
        pi = 3.1415926235897933
        ph = head / (self.embedding_range / pi)
        pr = relation / (self.embedding_range / pi)
        pt = tail / (self.embedding_range / pi)
        s = ph + (pr - pt) if hb else ph + pr - pt
        s = jnp.abs(jnp.sin(s))
        return self.gamma - jnp.sum(s, axis=2) * self.modulus


# TODO(synk): train_step / test_step (optimizer loop, argsort ranking, pickle I/O) are
# host-side orchestration, not kernel work, and are intentionally not translated.


if __name__ == "__main__":
    nentity, nrelation, gamma = 512, 32, 12.0

    def make_samples(key, batch, neg):
        k1, k2, k3, k4 = jax.random.split(key, 4)
        heads = jax.random.randint(k1, (batch,), 0, nentity, dtype=jnp.int32)
        rels = jax.random.randint(k2, (batch,), 0, nrelation, dtype=jnp.int32)
        tails = jax.random.randint(k3, (batch,), 0, nentity, dtype=jnp.int32)
        pos = jnp.stack([heads, rels, tails], axis=1)                    # (B, 3)
        negs = jax.random.randint(k4, (batch, neg), 0, nentity, dtype=jnp.int32)
        return pos, negs

    all_configs = [
        ('TransE',   dict(double_entity_embedding=False, double_relation_embedding=False)),
        ('DistMult', dict(double_entity_embedding=False, double_relation_embedding=False)),
        ('ComplEx',  dict(double_entity_embedding=True,  double_relation_embedding=True)),
        ('RotatE',   dict(double_entity_embedding=True,  double_relation_embedding=False)),
        ('pRotatE',  dict(double_entity_embedding=False, double_relation_embedding=False)),
    ]

    # (batch, neg, hidden_dim, configs): small all-model sweep + a bigger case
    # that exercises the 2-D grid / 128-multiple negative tiling path.
    cases = [
        (2, 8, 32, all_configs),
        (16, 2048, 64, [all_configs[0], all_configs[3]]),
    ]

    key = jax.random.PRNGKey(0)
    ok = True
    for batch, neg, hidden_dim, configs in cases:
        key, sub = jax.random.split(key)
        positive_sample, negative_sample = make_samples(sub, batch, neg)
        for name, flags in configs:
            model = KGEModelPallas(name, nentity, nrelation, hidden_dim, gamma, **flags)
            for sample, mode in [
                (positive_sample, 'single'),
                ((positive_sample, negative_sample), 'tail-batch'),
                ((positive_sample, negative_sample), 'head-batch'),
            ]:
                out = jax.block_until_ready(model(sample, mode=mode))
                ref = jax.block_until_ready(model.reference(sample, mode=mode))
                if out.shape != ref.shape or not jnp.allclose(out, ref, rtol=1e-5, atol=1e-4):
                    ok = False
                    print(f"MISMATCH {name} mode={mode} B={batch} N={neg}: max abs err "
                          f"{float(jnp.max(jnp.abs(out - ref)))}")

    if ok:
        print("KERNEL_OK")
</pallas_src>

<mosaic_0001>
module attributes {stable_mosaic.version = 11 : i64} {
  func.func @_transe_kernel(%arg0: i32, %arg1: i32, %arg2: memref<1x2x32xf32, #tpu.memory_space<vmem>>, %arg3: memref<1x2x32xf32, #tpu.memory_space<vmem>>, %arg4: memref<1x2x32xf32, #tpu.memory_space<vmem>>, %arg5: memref<1x2xf32, #tpu.memory_space<vmem>>) attributes {dimension_semantics = [#tpu.dimension_semantics<parallel>, #tpu.dimension_semantics<parallel>], iteration_bounds = array<i64: 1, 1>, scalar_prefetch = 0 : i64, scratch_operands = 0 : i64, tpu.core_type = #tpu.core_type<tc>, window_params = [{transform_indices = @transform_0, window_bounds = array<i64: 1, 2, 32>}, {transform_indices = @transform_1, window_bounds = array<i64: 1, 2, 32>}, {transform_indices = @transform_2, window_bounds = array<i64: 1, 2, 32>}, {transform_indices = @transform_3, window_bounds = array<i64: 1, 2>}]} {
    %c0 = arith.constant 0 : index
    %c0_0 = arith.constant 0 : index
    %c0_1 = arith.constant 0 : index
    %0 = vector.load %arg2[%c0, %c0_0, %c0_1] : memref<1x2x32xf32, #tpu.memory_space<vmem>>, vector<1x2x32xf32>
    %c0_2 = arith.constant 0 : index
    %c0_3 = arith.constant 0 : index
    %c0_4 = arith.constant 0 : index
    %1 = vector.load %arg3[%c0_2, %c0_3, %c0_4] : memref<1x2x32xf32, #tpu.memory_space<vmem>>, vector<1x2x32xf32>
    %c0_5 = arith.constant 0 : index
    %c0_6 = arith.constant 0 : index
    %c0_7 = arith.constant 0 : index
    %2 = vector.load %arg4[%c0_5, %c0_6, %c0_7] : memref<1x2x32xf32, #tpu.memory_space<vmem>>, vector<1x2x32xf32>
    %3 = arith.addf %0, %1 : vector<1x2x32xf32>
    %4 = arith.subf %3, %2 : vector<1x2x32xf32>
    %5 = math.absf %4 : vector<1x2x32xf32>
    %cst = arith.constant dense<0.000000e+00> : vector<1x2xf32>
    %6 = vector.multi_reduction <add>, %5, %cst [2] : vector<1x2x32xf32> to vector<1x2xf32>
    %cst_8 = arith.constant 1.200000e+01 : f32
    %7 = vector.broadcast %cst_8 : f32 to vector<1x2xf32>
    %8 = arith.subf %7, %6 : vector<1x2xf32>
    %c0_9 = arith.constant 0 : index
    %c0_10 = arith.constant 0 : index
    %9 = vector.load %arg5[%c0_9, %c0_10] : memref<1x2xf32, #tpu.memory_space<vmem>>, vector<1x2xf32>
    tpu.vector_store %arg5[%c0_9, %c0_10], %8 {strides = array<i32>} : memref<1x2xf32, #tpu.memory_space<vmem>>, vector<1x2xf32>,
    return
  }
  func.func @transform_0(%arg0: i32, %arg1: i32) -> (i32, i32, i32) {
    %c0_i32 = arith.constant 0 : i32
    %c0_i32_0 = arith.constant 0 : i32
    return %arg0, %arg1, %c0_i32 : i32, i32, i32
  }
  func.func @transform_1(%arg0: i32, %arg1: i32) -> (i32, i32, i32) {
    %c0_i32 = arith.constant 0 : i32
    %c0_i32_0 = arith.constant 0 : i32
    return %arg0, %arg1, %c0_i32 : i32, i32, i32
  }
  func.func @transform_2(%arg0: i32, %arg1: i32) -> (i32, i32, i32) {
    %c0_i32 = arith.constant 0 : i32
    %c0_i32_0 = arith.constant 0 : i32
    return %arg0, %arg1, %c0_i32 : i32, i32, i32
  }
  func.func @transform_3(%arg0: i32, %arg1: i32) -> (i32, i32) {
    %c0_i32 = arith.constant 0 : i32
    return %arg0, %arg1 : i32, i32
  }
}

</mosaic_0001>

<llo_original>
// kernel: tpu_custom_call.1
$region0: #{tpu_custom_call.1}
  #allocation0 [shape = 'u32[]', space=smem, size = 0x4, offset = 0x4, fixed_abs, tag = 'smem constant byte address 0x4 - core index']
  #allocation1 [shape = 'u32[144,128]{1,0:T(1,128)}', space=vmem, size = 0x12000, scoped, tag = 'internal scratch']
  %s0 = inlined_call_operand.hbm [shape: f32[1,2,32], index: 0, kind: input, shape index: {}]
  %s1 = inlined_call_operand.vmem [shape: f32[1,2,32], index: 1, kind: input, shape index: {}]
  %s2 = inlined_call_operand.vmem [shape: f32[1,2,32], index: 2, kind: input, shape index: {}]
  %s3 = inlined_call_operand.hbm [shape: f32[1,2], index: 3, kind: output, shape index: {}]
  %s4 = sld [smem:[#allocation0]]
  $region26: #{tpu_custom_call.1} parent=0
    _
  %s6 = ssub.s32 1, %s4
  %s7 = scalar_select 0, %s6, %s4
  $region1: #{tpu_custom_call.1} parent=0
    #allocation2 [shape = 'u8[1024]{0}', space=vmem, size = 0x400, scoped, tag = 'input window, operand 0, single buffered']
    #allocation3 [shape = 's32[1]{0}', space=sflag, size = 0x4, scoped, tag = 'scoped memory for tpu_custom_call.1']
    #allocation4 [shape = 's32[1]{0}', space=sflag, size = 0x4, scoped, tag = 'scoped memory for tpu_custom_call.1']
    #allocation5 [shape = 'u8[512]{0}', space=vmem, size = 0x400, scoped, tag = 'output window, operand 0, single buffered']
    %8 = vsyncpa [#allocation3], 0
    %9 = vsyncpa [#allocation4], 0
    // Predicated region
    $region2: #{tpu_custom_call.1} parent=1 // pred_check
      _
    $region3: #{tpu_custom_call.1} parent=1 // pred_check_branch
      %11 = sbr.rel (0) target = $region5
    $region4: #{tpu_custom_call.1} parent=1 // pred_region
      %s13 = ssub.s32 32, 32
      %14 = vsyncadd [#allocation3], %s13
      %s16 = sshll.u32 [#allocation2], 4
      %s17 = int_to_ptr.vmem [resolvable:$true] %s16
      %19 = dma.hbm_to_vmem [thread:$0]  %s0, 32, %s17, [#allocation3]
    $region5: #{tpu_custom_call.1} parent=1 // pred_fallthru
      _
    // Predicated region
    $region6: #{tpu_custom_call.1} parent=1 // pred_check
      _
    $region7: #{tpu_custom_call.1} parent=1 // pred_check_branch
      %21 = sbr.rel (0) target = $region9
    $region8: #{tpu_custom_call.1} parent=1 // pred_region
      _
    $region9: #{tpu_custom_call.1} parent=1 // pred_fallthru
      _
    // Predicated region
    $region10: #{tpu_custom_call.1} parent=1 // pred_check
      _
    $region11: #{tpu_custom_call.1} parent=1 // pred_check_branch
      %23 = sbr.rel (0) target = $region13
    $region12: #{tpu_custom_call.1} parent=1 // pred_region
      _
    $region13: #{tpu_custom_call.1} parent=1 // pred_fallthru
      _
    // Predicated region
    $region14: #{tpu_custom_call.1} parent=1 // pred_check
      _
    $region15: #{tpu_custom_call.1} parent=1 // pred_check_branch
      %25 = sbr.rel (0) target = $region17
    $region16: #{tpu_custom_call.1} parent=1 // pred_region
      %26 = dma.done [#allocation3], 32
    $region17: #{tpu_custom_call.1} parent=1 // pred_fallthru
      _
    %v27 = vld [vmem:[#allocation2] sm:$0x3]
    %v28 = vld [vmem:[%s1] sm:$0x3]
    %v29 = vld [vmem:[%s2] sm:$0x3]
    %v30 = vadd.f32 %v27, %v28
    %v31 = vsub.f32 %v30, %v29
    %v32 = vand.u32 2147483647, %v31
    %vm33 = vcmask 254976
    %v34 = vsel %vm33, %v32, 0.0
    %35 = vadd.xlane.f32.xlu0 %v34
    %v36 = vpop.xlane.xlu0 %35
    %v37 = vsub.f32 12.0, %v36
    %v39 = vlaneseq
    %v40 = vand.u32 %v39, 127
    %v41 = vlaneseq
    %v42 = vshrl.u32 %v41, 7
    %v43 = vsub.s32 %v40, %v42
    %v44 = vrot.slane %v37, %v43
    %vm46 = vcmask 8192
    %47 = vst.msk [vmem:[#allocation5] sm:$0x1] %vm46, %v44
    // Predicated region
    $region18: #{tpu_custom_call.1} parent=1 // pred_check
      _
    $region19: #{tpu_custom_call.1} parent=1 // pred_check_branch
      %49 = sbr.rel (0) target = $region21
    $region20: #{tpu_custom_call.1} parent=1 // pred_region
      %s51 = ssub.s32 16, 16
      %52 = vsyncadd [#allocation4], %s51
      %s54 = sshll.u32 [#allocation5], 4
      %s55 = int_to_ptr.vmem [resolvable:$true] %s54
      %57 = dma.vmem_to_hbm [thread:$0]  %s55, 16, %s3, [#allocation4]
    $region21: #{tpu_custom_call.1} parent=1 // pred_fallthru
      _
    // Predicated region
    $region22: #{tpu_custom_call.1} parent=1 // pred_check
      _
    $region23: #{tpu_custom_call.1} parent=1 // pred_check_branch
      %59 = sbr.rel (0) target = $region25
    $region24: #{tpu_custom_call.1} parent=1 // pred_region
      %60 = dma.done [#allocation4], 16
    $region25: #{tpu_custom_call.1} parent=1 // pred_fallthru
      _
    %61 = vsyncpa [#allocation3], 1
    %62 = vsyncpa [#allocation4], 1

</llo_original>
